<compile_context>
chip_gen: v6e
topology: v6e:2x2x1
jax: 0.10.0
libtpu: 0.0.40
codegen_flags: <defaults>
</compile_context>

<pallas_src>
import functools
from typing import NamedTuple

import jax
import jax.numpy as jnp
from jax.experimental import pallas as pl
from jax.experimental.pallas import tpu as pltpu


def _round_up(x, m):
    return (x + m - 1) // m * m


class VMHeadSpec(NamedTuple):
    """Static tiling metadata (hashable -> usable as a jit static arg)."""
    tile_v: int        # vocab tile streamed per grid step (multiple of 128)
    num_splits: int    # leading 'parallel' grid axis (== #TensorCores used)
    steps: int         # vocab tiles per split (reduction axis)
    split_v: int       # padded vocab columns per split (= steps * tile_v)
    v_pad: int         # padded vocab size (= num_splits * split_v)
    vmem_limit: int    # scoped VMEM limit in bytes


def _hw_config():
    """Per-generation defaults (tile size, #TensorCores, scoped-VMEM budget)."""
    try:
        kind = jax.devices()[0].device_kind.lower()
    except Exception:  # pragma: no cover - no device visible at trace time
        kind = ""
    if "v7" in kind:            # 64 MiB VMEM per TC, 2 TCs, ~3.2 TB/s HBM
        return dict(num_splits=2, tile_v=2560, vmem_limit=56 * 1024 * 1024)
    if "v6" in kind or "v5" in kind:   # 128 MiB VMEM, 1 TC
        return dict(num_splits=1, tile_v=3200, vmem_limit=96 * 1024 * 1024)
    # unknown backend: conservative
    return dict(num_splits=1, tile_v=1280, vmem_limit=48 * 1024 * 1024)


def prepare_vm_weights(w_lm, w_ln, *, config=None):
    """One-time layout prep of the frozen lm_head / value-head weights.

    Runs OUTSIDE the jitted forward: any vocab padding is materialized here
    exactly once, never per call.  Returns (w_lm_padded, w_ln_padded, spec).
    """
    cfg = dict(_hw_config())
    if config:
        cfg.update(config)
    H, V = w_lm.shape
    assert w_ln.shape == (1, V)

    num_splits = max(1, int(cfg["num_splits"]))
    vmem_limit = int(cfg["vmem_limit"])

    # Clamp the tile for tiny vocabs.
    per_split = -(-V // num_splits)
    tile_v = min(int(cfg["tile_v"]), _round_up(per_split, 128))
    tile_v = max(128, _round_up(tile_v, 128))

    # Keep the double-buffered w_lm stream within ~80% of the scoped budget.
    w_bytes = jnp.dtype(w_lm.dtype).itemsize
    budget = int(0.8 * vmem_limit)
    while tile_v > 128 and 2 * H * tile_v * w_bytes > budget:
        tile_v -= 128

    # Prefer a pad-free tile if one exists within [tile_v/2, tile_v]
    # (e.g. V=32000, 1 split -> 3200; 2 splits -> none, pad once below).
    for cand in range(tile_v, max(128, tile_v // 2) - 1, -128):
        if V % (num_splits * cand) == 0:
            tile_v = cand
            break

    v_pad = _round_up(V, num_splits * tile_v)
    split_v = v_pad // num_splits
    steps = split_v // tile_v

    if v_pad != V:
        # One-time pad with zero columns (they contribute nothing).
        w_lm = jnp.pad(w_lm, ((0, 0), (0, v_pad - V)))
        w_ln = jnp.pad(w_ln, ((0, 0), (0, v_pad - V)))
    w_lm = jax.block_until_ready(w_lm)
    w_ln = jax.block_until_ready(w_ln)

    spec = VMHeadSpec(tile_v=tile_v, num_splits=num_splits, steps=steps,
                      split_v=split_v, v_pad=v_pad, vmem_limit=vmem_limit)
    return w_lm, w_ln, spec


def _vm_kernel(h_ref, wlm_ref, wln_ref, out_ref, acc_ref, *, tile_v):
    """Fused last-token logits tile + value-head weighted accumulation.

    grid = (num_splits ['parallel'], steps ['arbitrary', vocab reduction])
      h_ref   : (Bp, H)       last-token hidden states (bf16), VMEM-resident
      wlm_ref : (H, tile_v)   lm_head weight tile (streamed from HBM)
      wln_ref : (1, split_v)  value-head weights of this split, resident
      out_ref : (Bp, 1)       per-split partial value (split dim squeezed)
      acc_ref : (Bp, tile_v)  f32 wide accumulator (lane-sum deferred)
    """
    k = pl.program_id(1)

    @pl.when(k == 0)
    def _():
        acc_ref[...] = jnp.zeros_like(acc_ref)

    # logits[:, -1, :] tile on the MXU with f32 accumulation: (Bp,H)@(H,TV).
    logits_tile = jnp.dot(h_ref[...], wlm_ref[...],
                          preferred_element_type=jnp.float32)
    # Value-head weights for this tile come from the resident split buffer.
    off = pl.multiple_of(k * tile_v, 128)
    wln_tile = wln_ref[:, pl.ds(off, tile_v)]
    # VALU-only weighted accumulation; no per-step cross-lane (XLU) reduce.
    acc_ref[...] += logits_tile * wln_tile

    @pl.when(k == pl.num_programs(1) - 1)
    def _():
        out_ref[...] = jnp.sum(acc_ref[...], axis=-1, keepdims=True)


def value_model_head(h_last, w_lm_p, w_ln_p, b_ln, spec: VMHeadSpec):
    """value = squeeze(LN(lm_head(h_last)), dim=1)  -> shape (B,)."""
    B, H = h_last.shape
    tile_v, num_splits, steps = spec.tile_v, spec.num_splits, spec.steps
    assert w_lm_p.shape == (H, spec.v_pad)
    assert w_ln_p.shape == (1, spec.v_pad)

    # Pad batch to the bf16 sublane granule (16) so MXU LHS tiles are
    # unmasked; h is tiny, cost negligible.
    granule = 16 if h_last.dtype == jnp.bfloat16 else 8
    B_pad = max(granule, _round_up(B, granule))
    if B_pad != B:
        h_last = jnp.pad(h_last, ((0, B_pad - B), (0, 0)))

    def h_index(c, k):
        return (0, 0)

    def wlm_index(c, k):
        return (0, c * steps + k)

    def wln_index(c, k):
        return (0, c)

    cost = pl.CostEstimate(
        flops=2 * B_pad * H * spec.v_pad + 2 * B_pad * spec.v_pad,
        transcendentals=0,
        bytes_accessed=(H * spec.v_pad * jnp.dtype(w_lm_p.dtype).itemsize
                        + spec.v_pad * 4
                        + B_pad * H * jnp.dtype(h_last.dtype).itemsize
                        + num_splits * B_pad * 4),
    )

    partials = pl.pallas_call(
        functools.partial(_vm_kernel, tile_v=tile_v),
        out_shape=jax.ShapeDtypeStruct((num_splits, B_pad, 1), jnp.float32),
        grid=(num_splits, steps),
        in_specs=[
            # hidden states: resident across the whole grid (one DMA)
            pl.BlockSpec((B_pad, H), h_index),
            # lm_head weight tile: streamed over the (split, step) vocab range
            pl.BlockSpec((H, tile_v), wlm_index),
            # value-head weights: whole split resident (one DMA per split)
            pl.BlockSpec((1, spec.split_v), wln_index),
        ],
        out_specs=pl.BlockSpec((None, B_pad, 1), lambda c, k: (c, 0, 0)),
        scratch_shapes=[pltpu.VMEM((B_pad, tile_v), jnp.float32)],
        compiler_params=pltpu.CompilerParams(
            dimension_semantics=("parallel", "arbitrary"),
            vmem_limit_bytes=spec.vmem_limit),
        cost_estimate=cost,
    )(h_last, w_lm_p, w_ln_p)

    # Combine per-core partial sums; add the nn.Linear bias in the wrapper.
    value = partials.sum(axis=0)[:B, 0] + b_ln[0]
    return value  # == .squeeze(dim=1)


def mistral_vm_forward(input_ids, attention_mask, params, spec: VMHeadSpec):
    """Glue mirroring Mistral_VM.forward.

    attention_mask is accepted for API parity; the stand-in base model does
    not attend across positions, and the original code reads logits[:, -1, :]
    regardless of masking.  # TODO(synk): real causal attention not modeled.
    """
    del attention_mask
    # Stand-in frozen base model: embed the last token -> (B, H) bf16.
    last_tok = input_ids[:, -1]
    h_last = jnp.take(params["emb"], last_tok, axis=0)
    # Fused Pallas hot path: lm_head logits + value head.
    return value_model_head(h_last, params["w_lm"], params["w_ln"],
                            params["b_ln"], spec)


def init_params(key, vocab, hidden):
    k_emb, k_lm, k_ln = jax.random.split(key, 3)
    emb = (jax.random.normal(k_emb, (vocab, hidden), jnp.float32) * 0.02
           ).astype(jnp.bfloat16)
    w_lm = (jax.random.normal(k_lm, (hidden, vocab), jnp.float32) * 0.02
            ).astype(jnp.bfloat16)
    # nn.Linear(vocab, 1): weight (1, vocab) f32, bias (1,) f32.
    bound = 1.0 / jnp.sqrt(vocab)
    w_ln = jax.random.uniform(k_ln, (1, vocab), jnp.float32, -bound, bound)
    b_ln = jnp.zeros((1,), jnp.float32)
    return {"emb": emb, "w_lm": w_lm, "w_ln": w_ln, "b_ln": b_ln}


if __name__ == "__main__":
    VOCAB = 500     # small stand-in for 32000 (non-multiple of 128 -> exercises padding)
    HIDDEN = 128
    BATCH = 2
    SEQ = 8

    key = jax.random.PRNGKey(0)
    k_ids, k_params = jax.random.split(key)
    input_ids = jax.random.randint(k_ids, (BATCH, SEQ), 0, VOCAB, jnp.int32)
    attention_mask = jnp.ones((BATCH, SEQ), jnp.int32)
    params = init_params(k_params, VOCAB, HIDDEN)

    # One-time weight prep (hardware-aware tiling; any vocab padding happens
    # HERE, never inside the jitted forward).
    w_lm_p, w_ln_p, spec = prepare_vm_weights(params["w_lm"], params["w_ln"])
    run_params = {"emb": params["emb"], "w_lm": w_lm_p, "w_ln": w_ln_p,
                  "b_ln": params["b_ln"]}

    # Pure-JAX reference.
    h_ref = jnp.take(params["emb"], input_ids[:, -1], axis=0).astype(jnp.float32)
    logits_ref = h_ref @ params["w_lm"].astype(jnp.float32)
    ref = logits_ref @ params["w_ln"][0] + params["b_ln"][0]

    # 1) Full forward with the hardware-default tiling.
    fwd = jax.jit(mistral_vm_forward, static_argnames="spec")
    values = jax.block_until_ready(
        fwd(input_ids, attention_mask, run_params, spec))
    assert values.shape == (BATCH,)
    assert jnp.allclose(values, ref, atol=1e-4, rtol=2e-2), (values, ref)

    # 2) Forced 2-split / small-tile config -> exercises the 'parallel' split,
    #    the multi-step vocab reduction and the in-kernel w_ln slicing.
    w_lm_s, w_ln_s, spec_s = prepare_vm_weights(
        params["w_lm"], params["w_ln"],
        config=dict(num_splits=2, tile_v=128, vmem_limit=48 * 1024 * 1024))
    h_last = jnp.take(params["emb"], input_ids[:, -1], axis=0)
    values_split = jax.block_until_ready(
        value_model_head(h_last, w_lm_s, w_ln_s, params["b_ln"], spec_s))
    assert values_split.shape == (BATCH,)
    assert jnp.allclose(values_split, ref, atol=1e-4, rtol=2e-2), (values_split, ref)

    print("KERNEL_OK")
</pallas_src>

<mosaic_0001>
module attributes {stable_mosaic.version = 11 : i64} {
  func.func @_vm_kernel(%arg0: i32, %arg1: i32, %arg2: memref<16x128xbf16, #tpu.memory_space<vmem>>, %arg3: memref<128x512xbf16, #tpu.memory_space<vmem>>, %arg4: memref<1x512xf32, #tpu.memory_space<vmem>>, %arg5: memref<1x16x1xf32, #tpu.memory_space<vmem>>, %arg6: memref<16x512xf32, #tpu.memory_space<vmem>>) attributes {dimension_semantics = [#tpu.dimension_semantics<parallel>, #tpu.dimension_semantics<arbitrary>], iteration_bounds = array<i64: 1, 1>, scalar_prefetch = 0 : i64, scratch_operands = 1 : i64, tpu.core_type = #tpu.core_type<tc>, window_params = [{pipeline_mode = #tpu.pipeline_mode<synchronous>, transform_indices = @transform_0, window_bounds = array<i64: 16, 128>}, {transform_indices = @transform_1, window_bounds = array<i64: 128, 512>}, {transform_indices = @transform_2, window_bounds = array<i64: 1, 512>}, {transform_indices = @transform_3, window_bounds = array<i64: 1, 16, 1>}]} {
    %c0_i32 = arith.constant 0 : i32
    %0 = arith.cmpi eq, %arg1, %c0_i32 : i32
    %1 = arith.extui %0 : i1 to i32
    %c0_i32_0 = arith.constant 0 : i32
    %2 = arith.cmpi ne, %1, %c0_i32_0 : i32
    scf.if %2 {
      %cst_11 = arith.constant 0.000000e+00 : f32
      %18 = vector.broadcast %cst_11 : f32 to vector<16x512xf32>
      %c0_12 = arith.constant 0 : index
      %c0_13 = arith.constant 0 : index
      %19 = vector.load %arg6[%c0_12, %c0_13] : memref<16x512xf32, #tpu.memory_space<vmem>>, vector<16x512xf32>
      tpu.vector_store %arg6[%c0_12, %c0_13], %18 {strides = array<i32>} : memref<16x512xf32, #tpu.memory_space<vmem>>, vector<16x512xf32>,
    } else {
    }
    %c0 = arith.constant 0 : index
    %c0_1 = arith.constant 0 : index
    %3 = vector.load %arg2[%c0, %c0_1] : memref<16x128xbf16, #tpu.memory_space<vmem>>, vector<16x128xbf16>
    %c0_2 = arith.constant 0 : index
    %c0_3 = arith.constant 0 : index
    %4 = vector.load %arg3[%c0_2, %c0_3] : memref<128x512xbf16, #tpu.memory_space<vmem>>, vector<128x512xbf16>
    %cst = arith.constant dense<0.000000e+00> : vector<16x512xf32>
    %5 = tpu.matmul %3, %4, %cst {dimension_numbers = #tpu.dot_dimension_numbers<[1], [0], [0], [1], [0, 0, 1, 1], [], []>} : vector<16x128xbf16>, vector<128x512xbf16>, vector<16x512xf32> -> vector<16x512xf32>
    %c512_i32 = arith.constant 512 : i32
    %6 = arith.muli %arg1, %c512_i32 : i32
    %7 = tpu.assume_multiple %6, 128 : i32
    %c0_4 = arith.constant 0 : index
    %8 = arith.index_cast %7 : i32 to index
    %9 = vector.load %arg4[%c0_4, %8] : memref<1x512xf32, #tpu.memory_space<vmem>>, vector<1x512xf32>
    %c0_5 = arith.constant 0 : index
    %c0_6 = arith.constant 0 : index
    %10 = vector.load %arg6[%c0_5, %c0_6] : memref<16x512xf32, #tpu.memory_space<vmem>>, vector<16x512xf32>
    %11 = vector.broadcast %9 : vector<1x512xf32> to vector<16x512xf32>
    %12 = arith.mulf %5, %11 : vector<16x512xf32>
    %13 = arith.addf %10, %12 : vector<16x512xf32>
    %c0_7 = arith.constant 0 : index
    %c0_8 = arith.constant 0 : index
    %14 = vector.load %arg6[%c0_7, %c0_8] : memref<16x512xf32, #tpu.memory_space<vmem>>, vector<16x512xf32>
    tpu.vector_store %arg6[%c0_7, %c0_8], %13 {strides = array<i32>} : memref<16x512xf32, #tpu.memory_space<vmem>>, vector<16x512xf32>,
    %c0_i32_9 = arith.constant 0 : i32
    %15 = arith.cmpi eq, %arg1, %c0_i32_9 : i32
    %16 = arith.extui %15 : i1 to i32
    %c0_i32_10 = arith.constant 0 : i32
    %17 = arith.cmpi ne, %16, %c0_i32_10 : i32
    scf.if %17 {
      %c0_11 = arith.constant 0 : index
      %c0_12 = arith.constant 0 : index
      %18 = vector.load %arg6[%c0_11, %c0_12] : memref<16x512xf32, #tpu.memory_space<vmem>>, vector<16x512xf32>
      %cst_13 = arith.constant dense<0.000000e+00> : vector<16xf32>
      %19 = vector.multi_reduction <add>, %18, %cst_13 [1] : vector<16x512xf32> to vector<16xf32>
      %20 = vector.shape_cast %19 : vector<16xf32> to vector<16x1xf32>
      %c0_14 = arith.constant 0 : index
      %c0_15 = arith.constant 0 : index
      %c0_16 = arith.constant 0 : index
      %21 = vector.load %arg5[%c0_14, %c0_15, %c0_16] : memref<1x16x1xf32, #tpu.memory_space<vmem>>, vector<1x16x1xf32>
      %22 = vector.shape_cast %21 : vector<1x16x1xf32> to vector<16x1xf32>
      %23 = vector.shape_cast %20 : vector<16x1xf32> to vector<1x16x1xf32>
      tpu.vector_store %arg5[%c0_14, %c0_15, %c0_16], %23 {strides = array<i32>} : memref<1x16x1xf32, #tpu.memory_space<vmem>>, vector<1x16x1xf32>,
    } else {
    }
    return
  }
  func.func @transform_0(%arg0: i32, %arg1: i32) -> (i32, i32) {
    %c0_i32 = arith.constant 0 : i32
    %c0_i32_0 = arith.constant 0 : i32
    %c0_i32_1 = arith.constant 0 : i32
    return %c0_i32, %c0_i32_0 : i32, i32
  }
  func.func @transform_1(%arg0: i32, %arg1: i32) -> (i32, i32) {
    %c1_i32 = arith.constant 1 : i32
    %0 = arith.muli %arg0, %c1_i32 : i32
    %1 = arith.addi %0, %arg1 : i32
    %c0_i32 = arith.constant 0 : i32
    %c0_i32_0 = arith.constant 0 : i32
    return %c0_i32, %1 : i32, i32
  }
  func.func @transform_2(%arg0: i32, %arg1: i32) -> (i32, i32) {
    %c0_i32 = arith.constant 0 : i32
    %c0_i32_0 = arith.constant 0 : i32
    return %c0_i32, %arg0 : i32, i32
  }
  func.func @transform_3(%arg0: i32, %arg1: i32) -> (i32, i32, i32) {
    %c0_i32 = arith.constant 0 : i32
    %c0_i32_0 = arith.constant 0 : i32
    %c0_i32_1 = arith.constant 0 : i32
    return %arg0, %c0_i32, %c0_i32_0 : i32, i32, i32
  }
}

</mosaic_0001>

<llo_original>
// kernel: mistral_vm_forward.1
$region0: #{mistral_vm_forward.1}
  #allocation0 [shape = 'u32[]', space=smem, size = 0x4, offset = 0x4, fixed_abs, tag = 'smem constant byte address 0x4 - core index']
  #allocation1 [shape = 'u32[144,128]{1,0:T(1,128)}', space=vmem, size = 0x12000, scoped, tag = 'internal scratch']
  #allocation2 [shape = 'f32[16,512]{1,0:T(8,128)}', space=vmem, size = 0x8000, scoped, tag = 'scratch operand']
  %s0 = inlined_call_operand.vmem [shape: bf16[16,128], index: 0, kind: input, shape index: {}]
  %s1 = inlined_call_operand.hbm [shape: bf16[128,512], index: 1, kind: input, shape index: {}]
  %s2 = inlined_call_operand.vmem [shape: f32[1,512], index: 2, kind: input, shape index: {}]
  %s3 = inlined_call_operand.vmem [shape: f32[1,16,1], index: 3, kind: output, shape index: {}]
  %s4 = sld [smem:[#allocation0]]
  $region34: #{mistral_vm_forward.1} parent=0
    _
  %s6 = ssub.s32 1, %s4
  %s7 = scalar_select 0, %s6, %s4
  $region1: #{mistral_vm_forward.1} parent=0
    #allocation3 [shape = 'u8[131072]{0}', space=vmem, size = 0x20000, scoped, tag = 'input window, operand 1, single buffered']
    #allocation4 [shape = 's32[1]{0}', space=sflag, size = 0x4, scoped, tag = 'scoped memory for mistral_vm_forward.1']
    %8 = vsyncpa [#allocation4], 0
    // Predicated region
    $region2: #{mistral_vm_forward.1} parent=1 // pred_check
      _
    $region3: #{mistral_vm_forward.1} parent=1 // pred_check_branch
      %10 = sbr.rel (0) target = $region5
    $region4: #{mistral_vm_forward.1} parent=1 // pred_region
      _
    $region5: #{mistral_vm_forward.1} parent=1 // pred_fallthru
      _
    // Predicated region
    $region6: #{mistral_vm_forward.1} parent=1 // pred_check
      _
    $region7: #{mistral_vm_forward.1} parent=1 // pred_check_branch
      %12 = sbr.rel (0) target = $region9
    $region8: #{mistral_vm_forward.1} parent=1 // pred_region
      %s13 = sadd.s32 0, 0
      %s14 = smul.u32 4, %s13
      %s16 = ssub.s32 4096, 4096
      %17 = vsyncadd [#allocation4], %s16
      %s18 = smul.addr %s14, 64
      %s19 = scalar_lea.hbm %s1, %s18
      %s20 = sshll.u32 [#allocation3], 4
      %s21 = int_to_ptr.vmem [resolvable:$true] %s20
      %26 = dma.hbm_to_vmem [thread:$0]  %s19, 4096, %s21, [#allocation4], 256, 256, 16
    $region9: #{mistral_vm_forward.1} parent=1 // pred_fallthru
      _
    // Predicated region
    $region10: #{mistral_vm_forward.1} parent=1 // pred_check
      _
    $region11: #{mistral_vm_forward.1} parent=1 // pred_check_branch
      %28 = sbr.rel (0) target = $region13
    $region12: #{mistral_vm_forward.1} parent=1 // pred_region
      _
    $region13: #{mistral_vm_forward.1} parent=1 // pred_fallthru
      _
    // Predicated region
    $region14: #{mistral_vm_forward.1} parent=1 // pred_check
      _
    $region15: #{mistral_vm_forward.1} parent=1 // pred_check_branch
      %30 = sbr.rel (0) target = $region17
    $region16: #{mistral_vm_forward.1} parent=1 // pred_region
      %31 = dma.done [#allocation4], 4096
    $region17: #{mistral_vm_forward.1} parent=1 // pred_fallthru
      _
    %s32 = sadd.s32 0, 0
    %s33 = smul.u32 4, %s32
    %p35 = scmp.eq.s32.totalorder 0, 0
    // Predicated region
    $region18: #{mistral_vm_forward.1} parent=1 // pred_check
      %p36 = pneg %p35
    $region19: #{mistral_vm_forward.1} parent=1 // pred_check_branch
      %38 = sbr.rel (%p36) target = $region21
    $region20: #{mistral_vm_forward.1} parent=1 // pred_region
      %39 = vst [vmem:[#allocation2] sm:$0xff] 0.0
      %40 = vst [vmem:[#allocation2 + $0x8] sm:$0xff] 0.0
      %41 = vst [vmem:[#allocation2 + $0x10] sm:$0xff] 0.0
      %42 = vst [vmem:[#allocation2 + $0x18] sm:$0xff] 0.0
      %43 = vst [vmem:[#allocation2 + $0x20] sm:$0xff] 0.0
      %44 = vst [vmem:[#allocation2 + $0x28] sm:$0xff] 0.0
      %45 = vst [vmem:[#allocation2 + $0x30] sm:$0xff] 0.0
      %46 = vst [vmem:[#allocation2 + $0x38] sm:$0xff] 0.0
    $region21: #{mistral_vm_forward.1} parent=1 // pred_fallthru
      _
    %v47 = vld [vmem:[%s0] sm:$0xf]
    %v48 = vld [vmem:[%s0 + $0x4] sm:$0xf]
    %v49 = vld [vmem:[#allocation3] sm:$0xff]
    %v50 = vld [vmem:[#allocation3 + $0x8] sm:$0xff]
    %v51 = vld [vmem:[#allocation3 + $0x10] sm:$0xff]
    %v52 = vld [vmem:[#allocation3 + $0x18] sm:$0xff]
    %v53 = vld [vmem:[#allocation3 + $0x20] sm:$0xff]
    %v54 = vld [vmem:[#allocation3 + $0x28] sm:$0xff]
    %v55 = vld [vmem:[#allocation3 + $0x30] sm:$0xff]
    %v56 = vld [vmem:[#allocation3 + $0x38] sm:$0xff]
    %v57 = vld [vmem:[#allocation3 + $0x40] sm:$0xff]
    %v58 = vld [vmem:[#allocation3 + $0x48] sm:$0xff]
    %v59 = vld [vmem:[#allocation3 + $0x50] sm:$0xff]
    %v60 = vld [vmem:[#allocation3 + $0x58] sm:$0xff]
    %v61 = vld [vmem:[#allocation3 + $0x60] sm:$0xff]
    %v62 = vld [vmem:[#allocation3 + $0x68] sm:$0xff]
    %v63 = vld [vmem:[#allocation3 + $0x70] sm:$0xff]
    %v64 = vld [vmem:[#allocation3 + $0x78] sm:$0xff]
    %v65 = vld [vmem:[#allocation3 + $0x80] sm:$0xff]
    %v66 = vld [vmem:[#allocation3 + $0x88] sm:$0xff]
    %v67 = vld [vmem:[#allocation3 + $0x90] sm:$0xff]
    %v68 = vld [vmem:[#allocation3 + $0x98] sm:$0xff]
    %v69 = vld [vmem:[#allocation3 + $0xa0] sm:$0xff]
    %v70 = vld [vmem:[#allocation3 + $0xa8] sm:$0xff]
    %v71 = vld [vmem:[#allocation3 + $0xb0] sm:$0xff]
    %v72 = vld [vmem:[#allocation3 + $0xb8] sm:$0xff]
    %v73 = vld [vmem:[#allocation3 + $0xc0] sm:$0xff]
    %v74 = vld [vmem:[#allocation3 + $0xc8] sm:$0xff]
    %v75 = vld [vmem:[#allocation3 + $0xd0] sm:$0xff]
    %v76 = vld [vmem:[#allocation3 + $0xd8] sm:$0xff]
    %v77 = vld [vmem:[#allocation3 + $0xe0] sm:$0xff]
    %v78 = vld [vmem:[#allocation3 + $0xe8] sm:$0xff]
    %v79 = vld [vmem:[#allocation3 + $0xf0] sm:$0xff]
    %v80 = vld [vmem:[#allocation3 + $0xf8] sm:$0xff]
    %v83 = vunpack.c.l.b16 %v47
    %v84 = vunpack.c.l.b16 %v48
    %v85 = vpack.c.b16 %v84, %v83
    %v119 = vunpack.c.l.b16 %v49
    %v120 = vunpack.c.h.b16 %v49
    %v121 = vunpack.c.l.b16 %v50
    %v122 = vunpack.c.h.b16 %v50
    %v123 = vunpack.c.l.b16 %v51
    %v124 = vunpack.c.h.b16 %v51
    %v125 = vunpack.c.l.b16 %v52
    %v126 = vunpack.c.h.b16 %v52
    %v127 = vunpack.c.l.b16 %v53
    %v128 = vunpack.c.h.b16 %v53
    %v129 = vunpack.c.l.b16 %v54
    %v130 = vunpack.c.h.b16 %v54
    %v131 = vunpack.c.l.b16 %v55
    %v132 = vunpack.c.h.b16 %v55
    %v133 = vunpack.c.l.b16 %v56
    %v134 = vunpack.c.h.b16 %v56
    %v135 = vunpack.c.l.b16 %v57
    %v136 = vunpack.c.h.b16 %v57
    %v137 = vunpack.c.l.b16 %v58
    %v138 = vunpack.c.h.b16 %v58
    %v139 = vunpack.c.l.b16 %v59
    %v140 = vunpack.c.h.b16 %v59
    %v141 = vunpack.c.l.b16 %v60
    %v142 = vunpack.c.h.b16 %v60
    %v143 = vunpack.c.l.b16 %v61
    %v144 = vunpack.c.h.b16 %v61
    %v145 = vunpack.c.l.b16 %v62
    %v146 = vunpack.c.h.b16 %v62
    %v147 = vunpack.c.l.b16 %v63
    %v148 = vunpack.c.h.b16 %v63
    %v149 = vunpack.c.l.b16 %v64
    %v150 = vunpack.c.h.b16 %v64
    %v151 = vunpack.c.l.b16 %v65
    %v152 = vunpack.c.h.b16 %v65
    %v153 = vunpack.c.l.b16 %v66
    %v154 = vunpack.c.h.b16 %v66
    %v155 = vunpack.c.l.b16 %v67
    %v156 = vunpack.c.h.b16 %v67
    %v157 = vunpack.c.l.b16 %v68
    %v158 = vunpack.c.h.b16 %v68
    %v159 = vunpack.c.l.b16 %v69
    %v160 = vunpack.c.h.b16 %v69
    %v161 = vunpack.c.l.b16 %v70
    %v162 = vunpack.c.h.b16 %v70
    %v163 = vunpack.c.l.b16 %v71
    %v164 = vunpack.c.h.b16 %v71
    %v165 = vunpack.c.l.b16 %v72
    %v166 = vunpack.c.h.b16 %v72
    %v167 = vunpack.c.l.b16 %v73
    %v168 = vunpack.c.h.b16 %v73
    %v169 = vunpack.c.l.b16 %v74
    %v170 = vunpack.c.h.b16 %v74
    %v171 = vunpack.c.l.b16 %v75
    %v172 = vunpack.c.h.b16 %v75
    %v173 = vunpack.c.l.b16 %v76
    %v174 = vunpack.c.h.b16 %v76
    %v175 = vunpack.c.l.b16 %v77
    %v176 = vunpack.c.h.b16 %v77
    %v177 = vunpack.c.l.b16 %v78
    %v178 = vunpack.c.h.b16 %v78
    %v179 = vunpack.c.l.b16 %v79
    %v180 = vunpack.c.h.b16 %v79
    %v181 = vunpack.c.l.b16 %v80
    %v182 = vunpack.c.h.b16 %v80
    %v183 = vpack.c.b16 %v123, %v119
    %v184 = vpack.c.b16 %v124, %v120
    %v185 = vpack.c.b16 %v125, %v121
    %v186 = vpack.c.b16 %v126, %v122
    %v187 = vpack.c.b16 %v131, %v127
    %v188 = vpack.c.b16 %v132, %v128
    %v189 = vpack.c.b16 %v133, %v129
    %v190 = vpack.c.b16 %v134, %v130
    %v191 = vpack.c.b16 %v139, %v135
    %v192 = vpack.c.b16 %v140, %v136
    %v193 = vpack.c.b16 %v141, %v137
    %v194 = vpack.c.b16 %v142, %v138
    %v195 = vpack.c.b16 %v147, %v143
    %v196 = vpack.c.b16 %v148, %v144
    %v197 = vpack.c.b16 %v149, %v145
    %v198 = vpack.c.b16 %v150, %v146
    %v199 = vpack.c.b16 %v155, %v151
    %v200 = vpack.c.b16 %v156, %v152
    %v201 = vpack.c.b16 %v157, %v153
    %v202 = vpack.c.b16 %v158, %v154
    %v203 = vpack.c.b16 %v163, %v159
    %v204 = vpack.c.b16 %v164, %v160
    %v205 = vpack.c.b16 %v165, %v161
    %v206 = vpack.c.b16 %v166, %v162
    %v207 = vpack.c.b16 %v171, %v167
    %v208 = vpack.c.b16 %v172, %v168
    %v209 = vpack.c.b16 %v173, %v169
    %v210 = vpack.c.b16 %v174, %v170
    %v211 = vpack.c.b16 %v179, %v175
    %v212 = vpack.c.b16 %v180, %v176
    %v213 = vpack.c.b16 %v181, %v177
    %v214 = vpack.c.b16 %v182, %v178
    %247 = vmatprep.subr.bf16.mxu0 %v212
    %248 = vmatpush1.bf16.msra.mxu0 %v211
    %249 = vmatprep.subr.bf16.mxu0 %v208
    %250 = vmatpush1.bf16.msra.mxu0 %v207
    %251 = vmatprep.subr.bf16.mxu0 %v204
    %252 = vmatpush1.bf16.msra.mxu0 %v203
    %253 = vmatprep.subr.bf16.mxu0 %v200
    %254 = vmatpush1.bf16.msra.mxu0 %v199
    %255 = vmatprep.subr.bf16.mxu0 %v196
    %256 = vmatpush1.bf16.msra.mxu0 %v195
    %257 = vmatprep.subr.bf16.mxu0 %v192
    %258 = vmatpush1.bf16.msra.mxu0 %v191
    %259 = vmatprep.subr.bf16.mxu0 %v188
    %260 = vmatpush1.bf16.msra.mxu0 %v187
    %261 = vmatprep.subr.bf16.mxu0 %v184
    %262 = vmatpush1.bf16.msra.mxu0 %v183
    %263 = vmatprep.subr.bf16.mxu0 0
    %264 = vmatpush2.bf16.msra.mxu0 0
    %265 = vmatprep.subr.bf16.mxu0 0
    %266 = vmatpush2.bf16.msra.mxu0 0
    %267 = vmatprep.subr.bf16.mxu0 0
    %268 = vmatpush2.bf16.msra.mxu0 0
    %269 = vmatprep.subr.bf16.mxu0 0
    %270 = vmatpush2.bf16.msra.mxu0 0
    %271 = vmatprep.subr.bf16.mxu0 0
    %272 = vmatpush2.bf16.msra.mxu0 0
    %273 = vmatprep.subr.bf16.mxu0 0
    %274 = vmatpush2.bf16.msra.mxu0 0
    %275 = vmatprep.subr.bf16.mxu0 0
    %276 = vmatpush2.bf16.msra.mxu0 0
    %277 = vmatprep.subr.bf16.mxu0 0
    %278 = vmatpush2.bf16.msra.mxu0 0
    %279 = vmatprep.mubr.bf16.mxu0 0
    %280 = vmatmul.mubr.bf16.gmra.mxu0 %v85
    %v281 = vpop.f32.mrf.mxu0
    %v282 = vadd.f32 0.0, %v281
    %v283 = vpop.f32.mrf.mxu0
    %v284 = vadd.f32 0.0, %v283
    %v285 = vpop.f32.mrf.mxu0
    %v286 = vadd.f32 0.0, %v285
    %v287 = vpop.f32.mrf.mxu0
    %v288 = vadd.f32 0.0, %v287
    %289 = vdwg.mxu0
    %290 = vmatprep.subr.bf16.mxu0 %v214
    %291 = vmatpush1.bf16.msra.mxu0 %v213
    %292 = vmatprep.subr.bf16.mxu0 %v210
    %293 = vmatpush1.bf16.msra.mxu0 %v209
    %294 = vmatprep.subr.bf16.mxu0 %v206
    %295 = vmatpush1.bf16.msra.mxu0 %v205
    %296 = vmatprep.subr.bf16.mxu0 %v202
    %297 = vmatpush1.bf16.msra.mxu0 %v201
    %298 = vmatprep.subr.bf16.mxu0 %v198
    %299 = vmatpush1.bf16.msra.mxu0 %v197
    %300 = vmatprep.subr.bf16.mxu0 %v194
    %301 = vmatpush1.bf16.msra.mxu0 %v193
    %302 = vmatprep.subr.bf16.mxu0 %v190
    %303 = vmatpush1.bf16.msra.mxu0 %v189
    %304 = vmatprep.subr.bf16.mxu0 %v186
    %305 = vmatpush1.bf16.msra.mxu0 %v185
    %306 = vmatprep.subr.bf16.mxu0 0
    %307 = vmatpush2.bf16.msra.mxu0 0
    %308 = vmatprep.subr.bf16.mxu0 0
    %309 = vmatpush2.bf16.msra.mxu0 0
    %310 = vmatprep.subr.bf16.mxu0 0
    %311 = vmatpush2.bf16.msra.mxu0 0
    %312 = vmatprep.subr.bf16.mxu0 0
    %313 = vmatpush2.bf16.msra.mxu0 0
    %314 = vmatprep.subr.bf16.mxu0 0
    %315 = vmatpush2.bf16.msra.mxu0 0
    %316 = vmatprep.subr.bf16.mxu0 0
    %317 = vmatpush2.bf16.msra.mxu0 0
    %318 = vmatprep.subr.bf16.mxu0 0
    %319 = vmatpush2.bf16.msra.mxu0 0
    %320 = vmatprep.subr.bf16.mxu0 0
    %321 = vmatpush2.bf16.msra.mxu0 0
    %322 = vmatprep.mubr.bf16.mxu0 0
    %323 = vmatmul.mubr.bf16.gmra.mxu0 %v85
    %v324 = vpop.f32.mrf.mxu0
    %v325 = vadd.f32 0.0, %v324
    %v326 = vpop.f32.mrf.mxu0
    %v327 = vadd.f32 0.0, %v326
    %v328 = vpop.f32.mrf.mxu0
    %v329 = vadd.f32 0.0, %v328
    %v330 = vpop.f32.mrf.mxu0
    %v331 = vadd.f32 0.0, %v330
    %332 = vdwg.mxu0
    %s333 = smul.u32 0, 512
    %s334 = sshra.s32 %s333, 7
    %s335 = sand.u32 %s333, 127
    %s336 = scalar_lea.vmem %s2, %s334
    %v337 = vld [vmem:[%s336] sm:$0xf]
    %v338 = vld [vmem:[#allocation2] sm:$0xff]
    %v339 = vld [vmem:[#allocation2 + $0x8] sm:$0xff]
    %v340 = vld [vmem:[#allocation2 + $0x10] sm:$0xff]
    %v341 = vld [vmem:[#allocation2 + $0x18] sm:$0xff]
    %v342 = vld [vmem:[#allocation2 + $0x20] sm:$0xff]
    %v343 = vld [vmem:[#allocation2 + $0x28] sm:$0xff]
    %v344 = vld [vmem:[#allocation2 + $0x30] sm:$0xff]
    %v345 = vld [vmem:[#allocation2 + $0x38] sm:$0xff]
    %v347 = vlaneseq
    %v348 = vshrl.u32 %v347, 7
    %v349 = vsub.s32 0, %v348
    %v350 = vrot.slane %v337, %v349
    %v351 = vlaneseq
    %v352 = vshrl.u32 %v351, 7
    %v353 = vsub.s32 1, %v352
    %v354 = vrot.slane %v337, %v353
    %v355 = vlaneseq
    %v356 = vshrl.u32 %v355, 7
    %v357 = vsub.s32 2, %v356
    %v358 = vrot.slane %v337, %v357
    %v359 = vlaneseq
    %v360 = vshrl.u32 %v359, 7
    %v361 = vsub.s32 3, %v360
    %v362 = vrot.slane %v337, %v361
    %v367 = vmul.f32 %v282, %v350
    %v368 = vmul.f32 %v284, %v354
    %v369 = vmul.f32 %v325, %v358
    %v370 = vmul.f32 %v327, %v362
    %v371 = vmul.f32 %v286, %v350
    %v372 = vmul.f32 %v288, %v354
    %v373 = vmul.f32 %v329, %v358
    %v374 = vmul.f32 %v331, %v362
    %v375 = vadd.f32 %v338, %v367
    %v376 = vadd.f32 %v339, %v368
    %v377 = vadd.f32 %v340, %v369
    %v378 = vadd.f32 %v341, %v370
    %v379 = vadd.f32 %v342, %v371
    %v380 = vadd.f32 %v343, %v372
    %v381 = vadd.f32 %v344, %v373
    %v382 = vadd.f32 %v345, %v374
    %383 = vst [vmem:[#allocation2] sm:$0xff] %v375
    %384 = vst [vmem:[#allocation2 + $0x8] sm:$0xff] %v376
    %385 = vst [vmem:[#allocation2 + $0x10] sm:$0xff] %v377
    %386 = vst [vmem:[#allocation2 + $0x18] sm:$0xff] %v378
    %387 = vst [vmem:[#allocation2 + $0x20] sm:$0xff] %v379
    %388 = vst [vmem:[#allocation2 + $0x28] sm:$0xff] %v380
    %389 = vst [vmem:[#allocation2 + $0x30] sm:$0xff] %v381
    %390 = vst [vmem:[#allocation2 + $0x38] sm:$0xff] %v382
    // Predicated region
    $region22: #{mistral_vm_forward.1} parent=1 // pred_check
      %p391 = pneg %p35
    $region23: #{mistral_vm_forward.1} parent=1 // pred_check_branch
      %393 = sbr.rel (%p391) target = $region25
    $region24: #{mistral_vm_forward.1} parent=1 // pred_region
      %v394 = vld [vmem:[#allocation2] sm:$0xff]
      %v395 = vld [vmem:[#allocation2 + $0x8] sm:$0xff]
      %v396 = vld [vmem:[#allocation2 + $0x10] sm:$0xff]
      %v397 = vld [vmem:[#allocation2 + $0x18] sm:$0xff]
      %v398 = vld [vmem:[#allocation2 + $0x20] sm:$0xff]
      %v399 = vld [vmem:[#allocation2 + $0x28] sm:$0xff]
      %v400 = vld [vmem:[#allocation2 + $0x30] sm:$0xff]
      %v401 = vld [vmem:[#allocation2 + $0x38] sm:$0xff]
      %v402 = vadd.f32 %v394, %v395
      %v403 = vadd.f32 %v402, %v396
      %v404 = vadd.f32 %v403, %v397
      %405 = vadd.xlane.f32.xlu0 %v404
      %v406 = vpop.xlane.xlu0 %405
      %v407 = vadd.f32 %v398, %v399
      %v408 = vadd.f32 %v407, %v400
      %v409 = vadd.f32 %v408, %v401
      %410 = vadd.xlane.f32.xlu0 %v409
      %v411 = vpop.xlane.xlu0 %410
      %vm412 = vcmask 7168
      %413 = vst.msk [vmem:[%s3] sm:$0xff] %vm412, %v406
      %414 = vst.msk [vmem:[%s3 + $0x8] sm:$0xff] %vm412, %v411
    $region25: #{mistral_vm_forward.1} parent=1 // pred_fallthru
      _
    // Predicated region
    $region26: #{mistral_vm_forward.1} parent=1 // pred_check
      _
    $region27: #{mistral_vm_forward.1} parent=1 // pred_check_branch
      %416 = sbr.rel (0) target = $region29
    $region28: #{mistral_vm_forward.1} parent=1 // pred_region
      _
    $region29: #{mistral_vm_forward.1} parent=1 // pred_fallthru
      _
    // Predicated region
    $region30: #{mistral_vm_forward.1} parent=1 // pred_check
      _
    $region31: #{mistral_vm_forward.1} parent=1 // pred_check_branch
      %418 = sbr.rel (0) target = $region33
    $region32: #{mistral_vm_forward.1} parent=1 // pred_region
      _
    $region33: #{mistral_vm_forward.1} parent=1 // pred_fallthru
      _
    %419 = vsyncpa [#allocation4], 1

</llo_original>
